<compile_context>
chip_gen: v7x
topology: tpu7x:2x2x1
jax: 0.10.0
libtpu: 0.0.40
codegen_flags: <defaults>
</compile_context>

<pallas_src>
import math

import jax
import jax.numpy as jnp
from jax.experimental import pallas as pl
from jax.experimental.pallas import tpu as pltpu


# ----------------------------- Pallas kernel -----------------------------

def _linear_bias_kernel(x_ref, w_ref, b_ref, o_ref):
    """One M-tile of  y = x @ w + b  with f32 MXU accumulation and fused bias epilogue."""
    acc = jnp.dot(x_ref[...], w_ref[...], preferred_element_type=jnp.float32)
    o_ref[...] = (acc + b_ref[...]).astype(o_ref.dtype)


# ----------------------------- tiling policy -----------------------------

def _round_up(v, m):
    return ((v + m - 1) // m) * m


def _pick_tiling(M, tm_max):
    """Choose (tm, Mp) so Mp % tm == 0, Mp >= M, and padding (Mp - M) is 0 whenever possible."""
    M8 = _round_up(M, 8)

    # Small ragged M: single full-extent block (legal via the full-dim exception), no pad.
    if M8 > M and M <= tm_max:
        return M, M

    # Zero-pad path: multiple-of-8 divisors of M8 (covers M8 == M, i.e. M % 8 == 0,
    # and the minimal <=7-row pad case for large ragged M).
    divs = [d for d in range(8, min(tm_max, M8) + 1, 8) if M8 % d == 0]
    tm = max(divs)
    grid = M8 // tm

    # v7x (2 TensorCores): if M is big enough to split and the grid is odd, prefer an
    # even grid as long as the tile stays at least half the best size. On v5e/v6e the
    # grid is a serial loop, so this costs at most one extra ~0.35us step.
    if M8 >= 1024 and grid % 2 == 1:
        even = [d for d in divs if (M8 // d) % 2 == 0 and 2 * d >= tm]
        if even:
            tm = max(even)

    # Degenerate divisor (e.g. M8 = 8 * prime, larger than tm_max): fall back to a
    # padded large tile rather than streaming 8-row tiles.
    if tm < 128 and M8 > tm_max:
        tm = min(tm_max, 512)
        return tm, _round_up(M8, tm)

    return tm, M8


# ----------------------------- wrapper -----------------------------

def linear_pallas(x, w_t, b, *, tm_max=1024, out_dtype=jnp.float32):
    """y = x @ w_t + b  (== torch.nn.functional.linear(x, w_t.T, b)).

    x:   (..., K)  arbitrary leading dims (flattened to M rows)
    w_t: (K, N)    transposed nn.Linear weight (kept in its producer dtype; no runtime cast)
    b:   (N,)      bias
    """
    orig_shape = x.shape
    K = orig_shape[-1]
    N = w_t.shape[1]
    M = math.prod(orig_shape[:-1]) if len(orig_shape) > 1 else 1
    xf = x.reshape(M, K)

    tm, Mp = _pick_tiling(M, tm_max)
    if Mp != M and M % 8 != 0 and M > tm_max:
        # Rare fallback path only: pad is <= (tm - 1) rows and unavoidable for awkward M.
        xf = jnp.pad(xf, ((0, Mp - M), (0, 0)))
    elif Mp != M:
        xf = jnp.pad(xf, ((0, Mp - M), (0, 0)))

    out = pl.pallas_call(
        _linear_bias_kernel,
        out_shape=jax.ShapeDtypeStruct((Mp, N), out_dtype),
        grid=(Mp // tm,),
        in_specs=[
            pl.BlockSpec((tm, K), lambda i: (i, 0)),   # activation M-tile (streamed)
            pl.BlockSpec((K, N), lambda i: (0, 0)),    # full weight, resident across grid
            pl.BlockSpec((1, N), lambda i: (0, 0)),    # fused bias row, resident
        ],
        out_specs=pl.BlockSpec((tm, N), lambda i: (i, 0)),
        compiler_params=pltpu.CompilerParams(
            dimension_semantics=("parallel",),          # lets v7x shard M-tiles across both TCs
        ),
    )(xf, w_t, b.reshape(1, N).astype(jnp.float32))

    if Mp != M:
        out = out[:M]
    return out.reshape(orig_shape[:-1] + (N,))


# ----------------------------- module forward -----------------------------

def auxiliary_network_mean_forward(params, x, *, out_dtype=jnp.float32):
    """AuxiliaryNetwork_mean.forward:  mean = fc_mean(x); u = mean; return u."""
    mean = linear_pallas(x, params["fc_mean_W_t"], params["fc_mean_b"], out_dtype=out_dtype)
    u = mean
    return u


def build_params(key, input_dim, output_dim):
    """nn.Linear default init: U(-1/sqrt(in), 1/sqrt(in)).  Weight stored pre-transposed (in, out)."""
    kw, kb = jax.random.split(key)
    bound = 1.0 / math.sqrt(input_dim)
    w_t = jax.random.uniform(kw, (input_dim, output_dim), jnp.float32, -bound, bound)
    b = jax.random.uniform(kb, (output_dim,), jnp.float32, -bound, bound)
    return dict(fc_mean_W_t=w_t, fc_mean_b=b)


# ----------------------------- main -----------------------------

if __name__ == "__main__":
    key = jax.random.PRNGKey(0)
    kx, kp, kx2, kx3 = jax.random.split(key, 4)

    batch, seq, input_dim, output_dim = 2, 8, 256, 128
    params = build_params(kp, input_dim, output_dim)
    fwd = jax.jit(auxiliary_network_mean_forward)

    # 1) Small aligned M (M=16): single block, grid=1, no padding.
    x = jax.random.normal(kx, (batch, seq, input_dim), jnp.float32)
    out = jax.block_until_ready(fwd(params, x))
    ref = x @ params["fc_mean_W_t"] + params["fc_mean_b"]
    assert out.shape == (batch, seq, output_dim) and out.dtype == jnp.float32
    assert bool(jnp.all(jnp.isfinite(out)))
    assert bool(jnp.allclose(out, ref, atol=1e-5, rtol=1e-5))

    # 2) Ragged large M (M=1200): divisor tiling -> tm=600, grid=2 (even, v7x-balanced), zero pad.
    x2 = jax.random.normal(kx2, (2, 600, input_dim), jnp.float32)
    out2 = jax.block_until_ready(fwd(params, x2))
    ref2 = x2 @ params["fc_mean_W_t"] + params["fc_mean_b"]
    assert out2.shape == (2, 600, output_dim)
    assert bool(jnp.allclose(out2, ref2, atol=1e-5, rtol=1e-5))

    # 3) Small non-multiple-of-8 M (M=14): full-extent block, grid=1, no padding.
    x3 = jax.random.normal(kx3, (2, 7, input_dim), jnp.float32)
    out3 = jax.block_until_ready(fwd(params, x3))
    ref3 = x3 @ params["fc_mean_W_t"] + params["fc_mean_b"]
    assert out3.shape == (2, 7, output_dim)
    assert bool(jnp.allclose(out3, ref3, atol=1e-5, rtol=1e-5))

    print("KERNEL_OK")
</pallas_src>

<mosaic_0001>
module attributes {stable_mosaic.version = 11 : i64} {
  func.func @_linear_bias_kernel(%arg0: i32, %arg1: memref<16x256xf32, #tpu.memory_space<vmem>>, %arg2: memref<256x128xf32, #tpu.memory_space<vmem>>, %arg3: memref<1x128xf32, #tpu.memory_space<vmem>>, %arg4: memref<16x128xf32, #tpu.memory_space<vmem>>) attributes {dimension_semantics = [#tpu.dimension_semantics<parallel>], iteration_bounds = array<i64: 1>, scalar_prefetch = 0 : i64, scratch_operands = 0 : i64, tpu.core_type = #tpu.core_type<tc>, window_params = [{transform_indices = @transform_0, window_bounds = array<i64: 16, 256>}, {pipeline_mode = #tpu.pipeline_mode<synchronous>, transform_indices = @transform_1, window_bounds = array<i64: 256, 128>}, {pipeline_mode = #tpu.pipeline_mode<synchronous>, transform_indices = @transform_2, window_bounds = array<i64: 1, 128>}, {transform_indices = @transform_3, window_bounds = array<i64: 16, 128>}]} {
    %c0 = arith.constant 0 : index
    %c0_0 = arith.constant 0 : index
    %0 = vector.load %arg1[%c0, %c0_0] : memref<16x256xf32, #tpu.memory_space<vmem>>, vector<16x256xf32>
    %c0_1 = arith.constant 0 : index
    %c0_2 = arith.constant 0 : index
    %1 = vector.load %arg2[%c0_1, %c0_2] : memref<256x128xf32, #tpu.memory_space<vmem>>, vector<256x128xf32>
    %cst = arith.constant dense<0.000000e+00> : vector<16x128xf32>
    %2 = tpu.matmul %0, %1, %cst {dimension_numbers = #tpu.dot_dimension_numbers<[1], [0], [0], [1], [0, 0, 1, 1], [], []>} : vector<16x256xf32>, vector<256x128xf32>, vector<16x128xf32> -> vector<16x128xf32>
    %c0_3 = arith.constant 0 : index
    %c0_4 = arith.constant 0 : index
    %3 = vector.load %arg3[%c0_3, %c0_4] : memref<1x128xf32, #tpu.memory_space<vmem>>, vector<1x128xf32>
    %4 = vector.broadcast %3 : vector<1x128xf32> to vector<16x128xf32>
    %5 = arith.addf %2, %4 : vector<16x128xf32>
    %c0_5 = arith.constant 0 : index
    %c0_6 = arith.constant 0 : index
    %6 = vector.load %arg4[%c0_5, %c0_6] : memref<16x128xf32, #tpu.memory_space<vmem>>, vector<16x128xf32>
    tpu.vector_store %arg4[%c0_5, %c0_6], %5 {strides = array<i32>} : memref<16x128xf32, #tpu.memory_space<vmem>>, vector<16x128xf32>,
    return
  }
  func.func @transform_0(%arg0: i32) -> (i32, i32) {
    %c0_i32 = arith.constant 0 : i32
    %c0_i32_0 = arith.constant 0 : i32
    return %arg0, %c0_i32 : i32, i32
  }
  func.func @transform_1(%arg0: i32) -> (i32, i32) {
    %c0_i32 = arith.constant 0 : i32
    %c0_i32_0 = arith.constant 0 : i32
    %c0_i32_1 = arith.constant 0 : i32
    return %c0_i32, %c0_i32_0 : i32, i32
  }
  func.func @transform_2(%arg0: i32) -> (i32, i32) {
    %c0_i32 = arith.constant 0 : i32
    %c0_i32_0 = arith.constant 0 : i32
    %c0_i32_1 = arith.constant 0 : i32
    return %c0_i32, %c0_i32_0 : i32, i32
  }
  func.func @transform_3(%arg0: i32) -> (i32, i32) {
    %c0_i32 = arith.constant 0 : i32
    %c0_i32_0 = arith.constant 0 : i32
    return %arg0, %c0_i32 : i32, i32
  }
}

</mosaic_0001>

<llo_original>
// kernel: auxiliary_network_mean_forward.1
$region0: #{auxiliary_network_mean_forward.1}
  #allocation0 [shape = 'u32[]', space=smem, size = 0x4, offset = 0x4, fixed_abs, tag = 'smem constant byte address 0x4 - core index']
  #allocation1 [shape = 'u32[144,128]{1,0:T(1,128)}', space=vmem, size = 0x12000, scoped, tag = 'internal scratch']
  %s0 = inlined_call_operand.hbm [shape: f32[16,256], index: 0, kind: input, shape index: {}]
  %s1 = inlined_call_operand.hbm [shape: f32[256,128], index: 1, kind: input, shape index: {}]
  %s2 = inlined_call_operand.vmem [shape: f32[1,128], index: 2, kind: input, shape index: {}]
  %s3 = inlined_call_operand.hbm [shape: f32[16,128], index: 3, kind: output, shape index: {}]
  %s4 = sld [smem:[#allocation0]]
  $region30: #{auxiliary_network_mean_forward.1} parent=0
    _
  %s6 = ssub.s32 1, %s4
  %s7 = scalar_select 0, %s6, %s4
  $region1: #{auxiliary_network_mean_forward.1} parent=0
    #allocation2 [shape = 'u8[16384]{0}', space=vmem, size = 0x4000, scoped, tag = 'input window, operand 0, single buffered']
    #allocation3 [shape = 's32[1]{0}', space=sflag, size = 0x4, scoped, tag = 'scoped memory for auxiliary_network_mean_forward.1']
    #allocation4 [shape = 's32[1]{0}', space=sflag, size = 0x4, scoped, tag = 'scoped memory for auxiliary_network_mean_forward.1']
    #allocation5 [shape = 'u8[131072]{0}', space=vmem, size = 0x20000, scoped, tag = 'input window, operand 1, single buffered']
    #allocation6 [shape = 's32[1]{0}', space=sflag, size = 0x4, scoped, tag = 'scoped memory for auxiliary_network_mean_forward.1']
    #allocation7 [shape = 'u8[8192]{0}', space=vmem, size = 0x2000, scoped, tag = 'output window, operand 0, single buffered']
    %8 = vsyncpa [#allocation3], 0
    %9 = vsyncpa [#allocation6], 0
    %10 = vsyncpa [#allocation4], 0
    // Predicated region
    $region2: #{auxiliary_network_mean_forward.1} parent=1 // pred_check
      _
    $region3: #{auxiliary_network_mean_forward.1} parent=1 // pred_check_branch
      %12 = sbr.rel (0) target = $region5
    $region4: #{auxiliary_network_mean_forward.1} parent=1 // pred_region
      %s14 = ssub.s32 512, 512
      %15 = vsyncadd [#allocation3], %s14
      %s16 = sshll.u32 [#allocation2], 4
      %s17 = int_to_ptr.vmem [resolvable:$true] %s16
      %22 = dma.hbm_to_vmem [thread:$0]  %s0, 512, %s17, [#allocation3], 256, 256, 16
    $region5: #{auxiliary_network_mean_forward.1} parent=1 // pred_fallthru
      _
    // Predicated region
    $region6: #{auxiliary_network_mean_forward.1} parent=1 // pred_check
      _
    $region7: #{auxiliary_network_mean_forward.1} parent=1 // pred_check_branch
      %24 = sbr.rel (0) target = $region9
    $region8: #{auxiliary_network_mean_forward.1} parent=1 // pred_region
      %s26 = ssub.s32 4096, 4096
      %27 = vsyncadd [#allocation6], %s26
      %s28 = sshll.u32 [#allocation5], 4
      %s29 = int_to_ptr.vmem [resolvable:$true] %s28
      %34 = dma.hbm_to_vmem [thread:$0]  %s1, 4096, %s29, [#allocation6], 128, 128, 8
    $region9: #{auxiliary_network_mean_forward.1} parent=1 // pred_fallthru
      _
    // Predicated region
    $region10: #{auxiliary_network_mean_forward.1} parent=1 // pred_check
      _
    $region11: #{auxiliary_network_mean_forward.1} parent=1 // pred_check_branch
      %36 = sbr.rel (0) target = $region13
    $region12: #{auxiliary_network_mean_forward.1} parent=1 // pred_region
      _
    $region13: #{auxiliary_network_mean_forward.1} parent=1 // pred_fallthru
      _
    // Predicated region
    $region14: #{auxiliary_network_mean_forward.1} parent=1 // pred_check
      _
    $region15: #{auxiliary_network_mean_forward.1} parent=1 // pred_check_branch
      %38 = sbr.rel (0) target = $region17
    $region16: #{auxiliary_network_mean_forward.1} parent=1 // pred_region
      %39 = dma.done [#allocation3], 512
    $region17: #{auxiliary_network_mean_forward.1} parent=1 // pred_fallthru
      _
    // Predicated region
    $region18: #{auxiliary_network_mean_forward.1} parent=1 // pred_check
      _
    $region19: #{auxiliary_network_mean_forward.1} parent=1 // pred_check_branch
      %41 = sbr.rel (0) target = $region21
    $region20: #{auxiliary_network_mean_forward.1} parent=1 // pred_region
      %42 = dma.done [#allocation6], 4096
    $region21: #{auxiliary_network_mean_forward.1} parent=1 // pred_fallthru
      _
    %v43 = vld [vmem:[#allocation2] sm:$0xff]
    %v44 = vld [vmem:[#allocation2 + $0x8] sm:$0xff]
    %v45 = vld [vmem:[#allocation2 + $0x10] sm:$0xff]
    %v46 = vld [vmem:[#allocation2 + $0x18] sm:$0xff]
    %v47 = vld [vmem:[#allocation5] sm:$0xff]
    %v48 = vld [vmem:[#allocation5 + $0x8] sm:$0xff]
    %v49 = vld [vmem:[#allocation5 + $0x10] sm:$0xff]
    %v50 = vld [vmem:[#allocation5 + $0x18] sm:$0xff]
    %v51 = vld [vmem:[#allocation5 + $0x20] sm:$0xff]
    %v52 = vld [vmem:[#allocation5 + $0x28] sm:$0xff]
    %v53 = vld [vmem:[#allocation5 + $0x30] sm:$0xff]
    %v54 = vld [vmem:[#allocation5 + $0x38] sm:$0xff]
    %v55 = vld [vmem:[#allocation5 + $0x40] sm:$0xff]
    %v56 = vld [vmem:[#allocation5 + $0x48] sm:$0xff]
    %v57 = vld [vmem:[#allocation5 + $0x50] sm:$0xff]
    %v58 = vld [vmem:[#allocation5 + $0x58] sm:$0xff]
    %v59 = vld [vmem:[#allocation5 + $0x60] sm:$0xff]
    %v60 = vld [vmem:[#allocation5 + $0x68] sm:$0xff]
    %v61 = vld [vmem:[#allocation5 + $0x70] sm:$0xff]
    %v62 = vld [vmem:[#allocation5 + $0x78] sm:$0xff]
    %v63 = vld [vmem:[#allocation5 + $0x80] sm:$0xff]
    %v64 = vld [vmem:[#allocation5 + $0x88] sm:$0xff]
    %v65 = vld [vmem:[#allocation5 + $0x90] sm:$0xff]
    %v66 = vld [vmem:[#allocation5 + $0x98] sm:$0xff]
    %v67 = vld [vmem:[#allocation5 + $0xa0] sm:$0xff]
    %v68 = vld [vmem:[#allocation5 + $0xa8] sm:$0xff]
    %v69 = vld [vmem:[#allocation5 + $0xb0] sm:$0xff]
    %v70 = vld [vmem:[#allocation5 + $0xb8] sm:$0xff]
    %v71 = vld [vmem:[#allocation5 + $0xc0] sm:$0xff]
    %v72 = vld [vmem:[#allocation5 + $0xc8] sm:$0xff]
    %v73 = vld [vmem:[#allocation5 + $0xd0] sm:$0xff]
    %v74 = vld [vmem:[#allocation5 + $0xd8] sm:$0xff]
    %v75 = vld [vmem:[#allocation5 + $0xe0] sm:$0xff]
    %v76 = vld [vmem:[#allocation5 + $0xe8] sm:$0xff]
    %v77 = vld [vmem:[#allocation5 + $0xf0] sm:$0xff]
    %v78 = vld [vmem:[#allocation5 + $0xf8] sm:$0xff]
    %v79 = vld [vmem:[%s2] sm:$0x1]
    %v81 = vlaneseq
    %v82 = vshrl.u32 %v81, 7
    %v83 = vsub.s32 0, %v82
    %v84 = vrot.slane %v79, %v83
    %86 = vmatprep.subr.mxu0 0.0
    %87 = vmatpush1.msra.mxu0 %v47
    %88 = vmatprep.subr.mxu0 0.0
    %89 = vmatpush1.msra.mxu0 %v48
    %90 = vmatprep.subr.mxu0 0.0
    %91 = vmatpush1.msra.mxu0 %v49
    %92 = vmatprep.subr.mxu0 0.0
    %93 = vmatpush1.msra.mxu0 %v50
    %94 = vmatprep.subr.mxu0 0.0
    %95 = vmatpush1.msra.mxu0 %v51
    %96 = vmatprep.subr.mxu0 0.0
    %97 = vmatpush1.msra.mxu0 %v52
    %98 = vmatprep.subr.mxu0 0.0
    %99 = vmatpush1.msra.mxu0 %v53
    %100 = vmatprep.subr.mxu0 0.0
    %101 = vmatpush1.msra.mxu0 %v54
    %102 = vmatprep.subr.mxu0 0.0
    %103 = vmatpush1.msra.mxu0 %v55
    %104 = vmatprep.subr.mxu0 0.0
    %105 = vmatpush1.msra.mxu0 %v56
    %106 = vmatprep.subr.mxu0 0.0
    %107 = vmatpush1.msra.mxu0 %v57
    %108 = vmatprep.subr.mxu0 0.0
    %109 = vmatpush1.msra.mxu0 %v58
    %110 = vmatprep.subr.mxu0 0.0
    %111 = vmatpush1.msra.mxu0 %v59
    %112 = vmatprep.subr.mxu0 0.0
    %113 = vmatpush1.msra.mxu0 %v60
    %114 = vmatprep.subr.mxu0 0.0
    %115 = vmatpush1.msra.mxu0 %v61
    %116 = vmatprep.subr.mxu0 0.0
    %117 = vmatpush1.msra.mxu0 %v62
    %118 = vmatprep.subr.mxu0 0.0
    %119 = vmatpush1.msra.mxu0 %v63
    %120 = vmatprep.subr.mxu0 0.0
    %121 = vmatpush1.msra.mxu0 %v64
    %122 = vmatprep.subr.mxu0 0.0
    %123 = vmatpush1.msra.mxu0 %v65
    %124 = vmatprep.subr.mxu0 0.0
    %125 = vmatpush1.msra.mxu0 %v66
    %126 = vmatprep.subr.mxu0 0.0
    %127 = vmatpush1.msra.mxu0 %v67
    %128 = vmatprep.subr.mxu0 0.0
    %129 = vmatpush1.msra.mxu0 %v68
    %130 = vmatprep.subr.mxu0 0.0
    %131 = vmatpush1.msra.mxu0 %v69
    %132 = vmatprep.subr.mxu0 0.0
    %133 = vmatpush1.msra.mxu0 %v70
    %134 = vmatprep.subr.mxu0 0.0
    %135 = vmatpush1.msra.mxu0 %v71
    %136 = vmatprep.subr.mxu0 0.0
    %137 = vmatpush1.msra.mxu0 %v72
    %138 = vmatprep.subr.mxu0 0.0
    %139 = vmatpush1.msra.mxu0 %v73
    %140 = vmatprep.subr.mxu0 0.0
    %141 = vmatpush1.msra.mxu0 %v74
    %142 = vmatprep.subr.mxu0 0.0
    %143 = vmatpush1.msra.mxu0 %v75
    %144 = vmatprep.subr.mxu0 0.0
    %145 = vmatpush1.msra.mxu0 %v76
    %146 = vmatprep.subr.mxu0 0.0
    %147 = vmatpush1.msra.mxu0 %v77
    %148 = vmatprep.subr.mxu0 0.0
    %149 = vmatpush1.msra.mxu0 %v78
    %150 = vmatprep.mubr.f32.mxu0 %v44
    %151 = vmatmul.mubr.f32.gmra.mrb[0].mxu0 %v43
    %v152 = vpop.f32.mrb[0].mxu0
    %v153 = vadd.f32 %v84, %v152
    %v154 = vpop.f32.mrb[0].mxu0
    %155 = vmatprep.mubr.f32.mxu0 %v46
    %156 = vmatmul.mubr.f32.gmra.mrb[0].mxu0 %v45
    %v157 = vpop.f32.mrb[0].mxu0
    %v158 = vadd.f32 %v84, %v157
    %v159 = vpop.f32.mrb[0].mxu0
    %160 = vdwg.mxu0
    %161 = vst [vmem:[#allocation7] sm:$0xff] %v153
    %162 = vst [vmem:[#allocation7 + $0x8] sm:$0xff] %v158
    // Predicated region
    $region22: #{auxiliary_network_mean_forward.1} parent=1 // pred_check
      _
    $region23: #{auxiliary_network_mean_forward.1} parent=1 // pred_check_branch
      %164 = sbr.rel (0) target = $region25
    $region24: #{auxiliary_network_mean_forward.1} parent=1 // pred_region
      %s166 = ssub.s32 256, 256
      %167 = vsyncadd [#allocation4], %s166
      %s168 = sshll.u32 [#allocation7], 4
      %s169 = int_to_ptr.vmem [resolvable:$true] %s168
      %174 = dma.vmem_to_hbm [thread:$0]  %s169, 256, %s3, [#allocation4], 128, 128, 8
    $region25: #{auxiliary_network_mean_forward.1} parent=1 // pred_fallthru
      _
    // Predicated region
    $region26: #{auxiliary_network_mean_forward.1} parent=1 // pred_check
      _
    $region27: #{auxiliary_network_mean_forward.1} parent=1 // pred_check_branch
      %176 = sbr.rel (0) target = $region29
    $region28: #{auxiliary_network_mean_forward.1} parent=1 // pred_region
      %177 = dma.done [#allocation4], 256
    $region29: #{auxiliary_network_mean_forward.1} parent=1 // pred_fallthru
      _
    %178 = vsyncpa [#allocation3], 1
    %179 = vsyncpa [#allocation6], 1
    %180 = vsyncpa [#allocation4], 1

</llo_original>
